<compile_context>
chip_gen: v5e
topology: v5e:2x2
jax: 0.10.0
libtpu: 0.0.40
codegen_flags: <defaults>
</compile_context>

<pallas_src>
import functools

import jax
import jax.numpy as jnp
from jax import lax
from jax.experimental import pallas as pl
from jax.experimental.pallas import tpu as pltpu

GAMMA = 1.5    # kernel specializes (1 - p_t) ** 1.5; change needs a pow path
ALPHA = 0.25
LANES = 128


def _focal_loss_kernel(pred_ref, true_ref, out_ref, *,
                       row_tile, sub_rows, valid_in_last_block):
    """Writes an (8, 128) lane-dense partial sum of the focal loss for this block."""
    i = pl.program_id(0)
    num_chunks = row_tile // sub_rows

    def chunk_loss(r0, masked):
        x = pred_ref[pl.ds(r0, sub_rows), :].astype(jnp.float32)   # logits
        z = true_ref[pl.ds(r0, sub_rows), :].astype(jnp.float32)   # targets in [0,1]

        # Numerically stable BCE-with-logits (reduction='none'), matching
        # torch.nn.BCEWithLogitsLoss:  max(x,0) - x*z + log(1 + exp(-|x|))
        t = jnp.exp(-jnp.abs(x))                       # exp(-|x|), reused for sigmoid
        bce = jnp.maximum(x, 0.0) - x * z + jnp.log1p(t)

        # sigmoid(x) from the already-computed exp(-|x|):
        #   x >= 0: 1/(1+t)      x < 0: t/(1+t)
        inv = pl.reciprocal(1.0 + t, approx=True)      # EUP vrcp (cheap slot)
        pred_prob = jnp.where(x >= 0.0, inv, t * inv)

        p_t = z * pred_prob + (1.0 - z) * (1.0 - pred_prob)
        alpha_factor = z * ALPHA + (1.0 - z) * (1.0 - ALPHA)
        one_minus_pt = jnp.maximum(1.0 - p_t, 0.0)     # clamp guards approx-rcp overshoot
        # (1 - p_t) ** 1.5  ==  (1 - p_t) * sqrt(1 - p_t)   [gamma = 1.5]
        loss = bce * alpha_factor * (one_minus_pt * jnp.sqrt(one_minus_pt))

        if masked:
            # Traced only for the final (partial) block: exclude the garbage
            # tail (OOB rows of the boundary block + pad-to-128 lane tail).
            # Block-local flat index stays < row_tile*128 (~1M) -> int32 safe.
            # Keep this as a select (NOT loss*mask) so NaN/Inf garbage cannot
            # propagate through a multiply.
            row = lax.broadcasted_iota(jnp.int32, (sub_rows, LANES), 0)
            lane = lax.broadcasted_iota(jnp.int32, (sub_rows, LANES), 1)
            idx = (r0 + row) * LANES + lane
            loss = jnp.where(idx < valid_in_last_block, loss, 0.0)
        return loss

    def block_sum(masked):
        def body(c, acc):
            r0 = pl.multiple_of(c * sub_rows, sub_rows)
            loss = chunk_loss(r0, masked)
            # (sub_rows,128) -> (8,128): sublane-aligned, pure vreg adds.
            return acc + jnp.sum(loss.reshape(sub_rows // 8, 8, LANES), axis=0)
        return lax.fori_loop(0, num_chunks, body,
                             jnp.zeros((8, LANES), jnp.float32))

    if valid_in_last_block == row_tile * LANES:
        # Fully aligned input: no masking anywhere.
        out_ref[...] = block_sum(False)
    else:
        last = pl.num_programs(0) - 1

        @pl.when(i < last)
        def _():
            out_ref[...] = block_sum(False)

        @pl.when(i == last)
        def _():
            out_ref[...] = block_sum(True)


def _round_up(x, m):
    return ((x + m - 1) // m) * m


def focal_loss(pred, true, *, row_tile=8192):
    """pred, true: float arrays of identical shape (e.g. NCHW). Returns scalar mean loss."""
    assert pred.shape == true.shape, (pred.shape, true.shape)
    total = pred.size

    pred_flat = jnp.ravel(pred)
    true_flat = jnp.ravel(true)

    rows = pl.cdiv(total, LANES)
    lane_pad = rows * LANES - total
    if lane_pad:
        # TODO(synk): totals that are not a multiple of 128 still pay one padded
        # copy per input; a fully copy-free path would need 1-D blocks or manual DMA.
        pred_flat = jnp.pad(pred_flat, (0, lane_pad))
        true_flat = jnp.pad(true_flat, (0, lane_pad))
    pred2d = pred_flat.reshape(rows, LANES)
    true2d = true_flat.reshape(rows, LANES)

    # Block row count: multiple of 16 (bf16 min sublane tile).  Boundary blocks
    # may be partial, so rows need NOT be a multiple of rt -> no row padding.
    rt = _round_up(min(row_tile, rows), 16)
    sub_rows = 64 if rt % 64 == 0 else (32 if rt % 32 == 0 else 16)
    num_blocks = pl.cdiv(rows, rt)
    # Valid elements inside the final (possibly partial) block -- static int.
    valid_in_last_block = total - (num_blocks - 1) * rt * LANES

    kernel = functools.partial(
        _focal_loss_kernel, row_tile=rt, sub_rows=sub_rows,
        valid_in_last_block=valid_in_last_block)

    itemsize = jnp.dtype(pred.dtype).itemsize
    cost = pl.CostEstimate(
        flops=18 * total,
        transcendentals=4 * total,                        # exp, log1p, rcp, sqrt
        bytes_accessed=2 * total * itemsize + num_blocks * 8 * LANES * 4,
    )

    partials = pl.pallas_call(
        kernel,
        out_shape=jax.ShapeDtypeStruct((num_blocks * 8, LANES), jnp.float32),
        grid_spec=pltpu.PrefetchScalarGridSpec(
            num_scalar_prefetch=0,
            grid=(num_blocks,),
            in_specs=[
                pl.BlockSpec((rt, LANES), lambda i: (i, 0)),
                pl.BlockSpec((rt, LANES), lambda i: (i, 0)),
            ],
            out_specs=pl.BlockSpec((8, LANES), lambda i: (i, 0)),
        ),
        compiler_params=pltpu.CompilerParams(
            dimension_semantics=("parallel",),
            # rt=8192 f32: 2 inputs x 2 pipeline buffers x 4 MiB = 16 MiB, which
            # exactly hits v5e's 16 MiB scoped default -> raise the cap.
            vmem_limit_bytes=32 << 20,
        ),
        cost_estimate=cost,
    )(pred2d, true2d)

    # reduction == 'mean' (final cross-block/lane reduce done once, in the wrapper)
    return jnp.sum(partials) / jnp.float32(total)


def _focal_loss_ref(pred, true):
    """Pure-JAX reference mirroring the PyTorch module."""
    x = pred.astype(jnp.float32)
    z = true.astype(jnp.float32)
    bce = jnp.maximum(x, 0.0) - x * z + jnp.log1p(jnp.exp(-jnp.abs(x)))
    p = jax.nn.sigmoid(x)
    p_t = z * p + (1.0 - z) * (1.0 - p)
    alpha_factor = z * ALPHA + (1.0 - z) * (1.0 - ALPHA)
    mod = (1.0 - p_t) ** GAMMA
    return jnp.mean(bce * alpha_factor * mod)


if __name__ == "__main__":
    key = jax.random.PRNGKey(0)
    k1, k2, k3, k4 = jax.random.split(key, 4)

    # NCHW: batch=2, channels=4, spatial=16x16 -> 2048 elements (128-aligned path).
    pred = jax.random.normal(k1, (2, 4, 16, 16), dtype=jnp.float32)
    true = (jax.random.uniform(k2, (2, 4, 16, 16)) > 0.5).astype(jnp.float32)
    out = jax.block_until_ready(focal_loss(pred, true))
    ref = _focal_loss_ref(pred, true)
    # approx reciprocal (EUP vrcp) perturbs the focal weight slightly; the mean
    # stays well within 1e-3 relative of the exact reference.
    assert jnp.allclose(out, ref, rtol=2e-3, atol=1e-6), (out, ref)

    # Misaligned total (3*5*7*11 = 1155) exercises the masked partial last block.
    pred2 = jax.random.normal(k3, (3, 5, 7, 11), dtype=jnp.float32)
    true2 = (jax.random.uniform(k4, (3, 5, 7, 11)) > 0.5).astype(jnp.float32)
    out2 = jax.block_until_ready(focal_loss(pred2, true2))
    ref2 = _focal_loss_ref(pred2, true2)
    assert jnp.allclose(out2, ref2, rtol=2e-3, atol=1e-6), (out2, ref2)

    print("KERNEL_OK")
</pallas_src>

<mosaic_0001>
module attributes {stable_mosaic.version = 11 : i64} {
  func.func @_focal_loss_kernel(%arg0: i32, %arg1: memref<16x128xf32, #tpu.memory_space<vmem>>, %arg2: memref<16x128xf32, #tpu.memory_space<vmem>>, %arg3: memref<8x128xf32, #tpu.memory_space<vmem>>) attributes {dimension_semantics = [#tpu.dimension_semantics<parallel>], iteration_bounds = array<i64: 1>, scalar_prefetch = 0 : i64, scratch_operands = 0 : i64, tpu.core_type = #tpu.core_type<tc>, window_params = [{transform_indices = @transform_0, window_bounds = array<i64: 16, 128>}, {transform_indices = @transform_1, window_bounds = array<i64: 16, 128>}, {transform_indices = @transform_2, window_bounds = array<i64: 8, 128>}]} {
    %cst = arith.constant 0.000000e+00 : f32
    %0 = vector.broadcast %cst : f32 to vector<8x128xf32>
    %c0_i32 = arith.constant 0 : i32
    %c16_i32 = arith.constant 16 : i32
    %1 = arith.muli %c0_i32, %c16_i32 : i32
    %2 = tpu.assume_multiple %1, 16 : i32
    %3 = arith.index_cast %2 : i32 to index
    %c0 = arith.constant 0 : index
    %4 = vector.load %arg1[%3, %c0] : memref<16x128xf32, #tpu.memory_space<vmem>>, vector<16x128xf32>
    %5 = arith.index_cast %2 : i32 to index
    %c0_0 = arith.constant 0 : index
    %6 = vector.load %arg2[%5, %c0_0] : memref<16x128xf32, #tpu.memory_space<vmem>>, vector<16x128xf32>
    %7 = math.absf %4 : vector<16x128xf32>
    %cst_1 = arith.constant 0.000000e+00 : f32
    %8 = vector.broadcast %cst_1 : f32 to vector<16x128xf32>
    %9 = arith.subf %8, %7 : vector<16x128xf32>
    %10 = math.exp %9 : vector<16x128xf32>
    %cst_2 = arith.constant 0.000000e+00 : f32
    %11 = vector.broadcast %cst_2 : f32 to vector<16x128xf32>
    %12 = arith.maximumf %4, %11 : vector<16x128xf32>
    %13 = arith.mulf %4, %6 : vector<16x128xf32>
    %14 = arith.subf %12, %13 : vector<16x128xf32>
    %15 = math.log1p %10 : vector<16x128xf32>
    %16 = arith.addf %14, %15 : vector<16x128xf32>
    %cst_3 = arith.constant 1.000000e+00 : f32
    %17 = vector.broadcast %cst_3 : f32 to vector<16x128xf32>
    %18 = arith.addf %17, %10 : vector<16x128xf32>
    %19 = tpu.reciprocal %18 {approx = true} : vector<16x128xf32> -> vector<16x128xf32>
    %cst_4 = arith.constant 0.000000e+00 : f32
    %20 = vector.broadcast %cst_4 : f32 to vector<16x128xf32>
    %21 = arith.cmpf oge, %4, %20 : vector<16x128xf32>
    %22 = arith.mulf %10, %19 : vector<16x128xf32>
    %23 = arith.select %21, %19, %22 : vector<16x128xi1>, vector<16x128xf32>
    %24 = arith.mulf %6, %23 : vector<16x128xf32>
    %cst_5 = arith.constant 1.000000e+00 : f32
    %25 = vector.broadcast %cst_5 : f32 to vector<16x128xf32>
    %26 = arith.subf %25, %6 : vector<16x128xf32>
    %cst_6 = arith.constant 1.000000e+00 : f32
    %27 = vector.broadcast %cst_6 : f32 to vector<16x128xf32>
    %28 = arith.subf %27, %23 : vector<16x128xf32>
    %29 = arith.mulf %26, %28 : vector<16x128xf32>
    %30 = arith.addf %24, %29 : vector<16x128xf32>
    %cst_7 = arith.constant 2.500000e-01 : f32
    %31 = vector.broadcast %cst_7 : f32 to vector<16x128xf32>
    %32 = arith.mulf %6, %31 : vector<16x128xf32>
    %cst_8 = arith.constant 1.000000e+00 : f32
    %33 = vector.broadcast %cst_8 : f32 to vector<16x128xf32>
    %34 = arith.subf %33, %6 : vector<16x128xf32>
    %cst_9 = arith.constant 7.500000e-01 : f32
    %35 = vector.broadcast %cst_9 : f32 to vector<16x128xf32>
    %36 = arith.mulf %34, %35 : vector<16x128xf32>
    %37 = arith.addf %32, %36 : vector<16x128xf32>
    %cst_10 = arith.constant 1.000000e+00 : f32
    %38 = vector.broadcast %cst_10 : f32 to vector<16x128xf32>
    %39 = arith.subf %38, %30 : vector<16x128xf32>
    %cst_11 = arith.constant 0.000000e+00 : f32
    %40 = vector.broadcast %cst_11 : f32 to vector<16x128xf32>
    %41 = arith.maximumf %39, %40 : vector<16x128xf32>
    %42 = arith.mulf %16, %37 : vector<16x128xf32>
    %43 = math.sqrt %41 : vector<16x128xf32>
    %44 = arith.mulf %41, %43 : vector<16x128xf32>
    %45 = arith.mulf %42, %44 : vector<16x128xf32>
    %46 = vector.shape_cast %45 : vector<16x128xf32> to vector<2x8x128xf32>
    %cst_12 = arith.constant dense<0.000000e+00> : vector<8x128xf32>
    %47 = vector.multi_reduction <add>, %46, %cst_12 [0] : vector<2x8x128xf32> to vector<8x128xf32>
    %48 = arith.addf %0, %47 : vector<8x128xf32>
    %c1_i32 = arith.constant 1 : i32
    %c0_13 = arith.constant 0 : index
    %c0_14 = arith.constant 0 : index
    %49 = vector.load %arg3[%c0_13, %c0_14] : memref<8x128xf32, #tpu.memory_space<vmem>>, vector<8x128xf32>
    tpu.vector_store %arg3[%c0_13, %c0_14], %48 {strides = array<i32>} : memref<8x128xf32, #tpu.memory_space<vmem>>, vector<8x128xf32>,
    return
  }
  func.func @transform_0(%arg0: i32) -> (i32, i32) {
    %c0_i32 = arith.constant 0 : i32
    %c0_i32_0 = arith.constant 0 : i32
    return %arg0, %c0_i32 : i32, i32
  }
  func.func @transform_1(%arg0: i32) -> (i32, i32) {
    %c0_i32 = arith.constant 0 : i32
    %c0_i32_0 = arith.constant 0 : i32
    return %arg0, %c0_i32 : i32, i32
  }
  func.func @transform_2(%arg0: i32) -> (i32, i32) {
    %c0_i32 = arith.constant 0 : i32
    %c0_i32_0 = arith.constant 0 : i32
    return %arg0, %c0_i32 : i32, i32
  }
}

</mosaic_0001>

<llo_original>
// kernel: tpu_custom_call.1
$region0: #{tpu_custom_call.1}
  #allocation0 [shape = 'u32[]', space=smem, size = 0x4, offset = 0x4, fixed_abs, tag = 'smem constant byte address 0x4 - core index']
  #allocation1 [shape = 'u32[72,128]{1,0:T(1,128)}', space=vmem, size = 0x9000, scoped, tag = 'internal scratch']
  %s0 = inlined_call_operand.hbm [shape: f32[16,128], index: 0, kind: input, shape index: {}]
  %s1 = inlined_call_operand.hbm [shape: f32[16,128], index: 1, kind: input, shape index: {}]
  %s2 = inlined_call_operand.hbm [shape: f32[8,128], index: 2, kind: output, shape index: {}]
  %s3 = sld [smem:[#allocation0]]
  $region26: #{tpu_custom_call.1} parent=0
    _
  %s5 = ssub.s32 1, %s3
  %s6 = scalar_select 0, %s5, %s3
  $region1: #{tpu_custom_call.1} parent=0
    #allocation2 [shape = 'u8[8192]{0}', space=vmem, size = 0x2000, scoped, tag = 'input window, operand 0, single buffered']
    #allocation3 [shape = 's32[1]{0}', space=sflag, size = 0x4, scoped, tag = 'scoped memory for tpu_custom_call.1']
    #allocation4 [shape = 's32[1]{0}', space=sflag, size = 0x4, scoped, tag = 'scoped memory for tpu_custom_call.1']
    #allocation5 [shape = 'u8[8192]{0}', space=vmem, size = 0x2000, scoped, tag = 'input window, operand 1, single buffered']
    #allocation6 [shape = 's32[1]{0}', space=sflag, size = 0x4, scoped, tag = 'scoped memory for tpu_custom_call.1']
    #allocation7 [shape = 'u8[4096]{0}', space=vmem, size = 0x1000, scoped, tag = 'output window, operand 0, single buffered']
    %7 = vsyncpa [#allocation3], 0
    %8 = vsyncpa [#allocation6], 0
    %9 = vsyncpa [#allocation4], 0
    // Predicated region
    $region2: #{tpu_custom_call.1} parent=1 // pred_check
      _
    $region3: #{tpu_custom_call.1} parent=1 // pred_check_branch
      %11 = sbr.rel (0) target = $region5
    $region4: #{tpu_custom_call.1} parent=1 // pred_region
      %13 = vsyncadd [#allocation3], 0
      %s14 = sshll.u32 %s0, 4
      %s15 = int_to_ptr.hbm [resolvable:$true] %s14
      %s16 = sshll.u32 [#allocation2], 4
      %s17 = int_to_ptr.vmem [resolvable:$true] %s16
      %22 = dma.hbm_to_vmem [thread:$0]  %s15, 256, %s17, [#allocation3], 128, 128, 8
    $region5: #{tpu_custom_call.1} parent=1 // pred_fallthru
      _
    // Predicated region
    $region6: #{tpu_custom_call.1} parent=1 // pred_check
      _
    $region7: #{tpu_custom_call.1} parent=1 // pred_check_branch
      %24 = sbr.rel (0) target = $region9
    $region8: #{tpu_custom_call.1} parent=1 // pred_region
      %26 = vsyncadd [#allocation6], 0
      %s27 = sshll.u32 %s1, 4
      %s28 = int_to_ptr.hbm [resolvable:$true] %s27
      %s29 = sshll.u32 [#allocation5], 4
      %s30 = int_to_ptr.vmem [resolvable:$true] %s29
      %35 = dma.hbm_to_vmem [thread:$0]  %s28, 256, %s30, [#allocation6], 128, 128, 8
    $region9: #{tpu_custom_call.1} parent=1 // pred_fallthru
      _
    // Predicated region
    $region10: #{tpu_custom_call.1} parent=1 // pred_check
      _
    $region11: #{tpu_custom_call.1} parent=1 // pred_check_branch
      %37 = sbr.rel (0) target = $region13
    $region12: #{tpu_custom_call.1} parent=1 // pred_region
      %39 = dma.done [#allocation3], 256
    $region13: #{tpu_custom_call.1} parent=1 // pred_fallthru
      _
    // Predicated region
    $region14: #{tpu_custom_call.1} parent=1 // pred_check
      _
    $region15: #{tpu_custom_call.1} parent=1 // pred_check_branch
      %41 = sbr.rel (0) target = $region17
    $region16: #{tpu_custom_call.1} parent=1 // pred_region
      %43 = dma.done [#allocation6], 256
    $region17: #{tpu_custom_call.1} parent=1 // pred_fallthru
      _
    %v44 = vld [vmem:[#allocation2] sm:$0xff]
    %v45 = vld [vmem:[#allocation2 + $0x8] sm:$0xff]
    %v46 = vld [vmem:[#allocation5] sm:$0xff]
    %v47 = vld [vmem:[#allocation5 + $0x8] sm:$0xff]
    %v48 = vand.u32 2147483647, %v44
    %v49 = vand.u32 2147483647, %v45
    %v50 = vsub.f32 0.0, %v48
    %v51 = vsub.f32 0.0, %v49
    %v52 = vmul.f32 %v50, 1.442695
    %v53 = vpow.pop %v52
    %v54 = vmul.f32 %v51, 1.442695
    %v55 = vpow.pop %v54
    %v56 = vmax.f32 %v44, 0.0
    %v57 = vmax.f32 %v45, 0.0
    %v58 = vmul.f32 %v44, %v46
    %v59 = vmul.f32 %v45, %v47
    %v60 = vsub.f32 %v56, %v58
    %v61 = vsub.f32 %v57, %v59
    %v62 = vadd.f32 %v53, 1.0
    %v63 = vlog2.pop %v62
    %v64 = vmul.f32 %v63, 0.6931472
    %v65 = vmul.f32 -0.5, %v53
    %v66 = vadd.f32 %v65, 1.0
    %v67 = vmul.f32 %v66, %v53
    %v68 = vand.u32 2147483647, %v53
    %vm69 = vcmp.lt.f32.partialorder %v68, 0.0004427343
    %v70 = vsel %vm69, %v67, %v64
    %v71 = vadd.f32 %v55, 1.0
    %v72 = vlog2.pop %v71
    %v73 = vmul.f32 %v72, 0.6931472
    %v74 = vmul.f32 -0.5, %v55
    %v75 = vadd.f32 %v74, 1.0
    %v76 = vmul.f32 %v75, %v55
    %v77 = vand.u32 2147483647, %v55
    %vm78 = vcmp.lt.f32.partialorder %v77, 0.0004427343
    %v79 = vsel %vm78, %v76, %v73
    %v80 = vadd.f32 %v60, %v70
    %v81 = vadd.f32 %v61, %v79
    %v82 = vadd.f32 %v53, 1.0
    %v83 = vadd.f32 %v55, 1.0
    %v84 = vrcp.pop %v82
    %v85 = vrcp.pop %v83
    %vm86 = vcmp.ge.f32.partialorder %v44, 0.0
    %vm87 = vcmp.ge.f32.partialorder %v45, 0.0
    %v88 = vmul.f32 %v53, %v84
    %v89 = vmul.f32 %v55, %v85
    %v90 = vsel %vm86, %v84, %v88
    %v91 = vsel %vm87, %v85, %v89
    %v92 = vmul.f32 %v46, %v90
    %v93 = vmul.f32 %v47, %v91
    %v94 = vsub.f32 1.0, %v46
    %v95 = vsub.f32 1.0, %v47
    %v96 = vsub.f32 1.0, %v90
    %v97 = vsub.f32 1.0, %v91
    %v98 = vmul.f32 %v94, %v96
    %v99 = vmul.f32 %v95, %v97
    %v100 = vadd.f32 %v92, %v98
    %v101 = vadd.f32 %v93, %v99
    %v102 = vmul.f32 %v46, 0.25
    %v103 = vmul.f32 %v47, 0.25
    %v104 = vmul.f32 %v94, 0.75
    %v105 = vmul.f32 %v95, 0.75
    %v106 = vadd.f32 %v102, %v104
    %v107 = vadd.f32 %v103, %v105
    %v108 = vsub.f32 1.0, %v100
    %v109 = vsub.f32 1.0, %v101
    %v110 = vmax.f32 %v108, 0.0
    %v111 = vmax.f32 %v109, 0.0
    %v112 = vmul.f32 %v80, %v106
    %v113 = vmul.f32 %v81, %v107
    %v114 = vrsqrt.pop %v110
    %v115 = vmul.f32 %v114, %v110
    %v116 = vmul.f32 %v115, %v114
    %v117 = vmul.f32 0.5, %v116
    %v118 = vsub.f32 1.5, %v117
    %v119 = vmul.f32 %v114, %v118
    %v120 = vmul.f32 %v110, %v119
    %vm121 = vcmp.eq.f32.partialorder %v110, inf
    %v122 = vsel %vm121, %v110, %v120
    %vm123 = vcmp.eq.f32.partialorder %v110, 0.0
    %v124 = vand.u32 %v110, 2147483648
    %v125 = vsel %vm123, %v124, %v122
    %v126 = vrsqrt.pop %v111
    %v127 = vmul.f32 %v126, %v111
    %v128 = vmul.f32 %v127, %v126
    %v129 = vmul.f32 0.5, %v128
    %v130 = vsub.f32 1.5, %v129
    %v131 = vmul.f32 %v126, %v130
    %v132 = vmul.f32 %v111, %v131
    %vm133 = vcmp.eq.f32.partialorder %v111, inf
    %v134 = vsel %vm133, %v111, %v132
    %vm135 = vcmp.eq.f32.partialorder %v111, 0.0
    %v136 = vand.u32 %v111, 2147483648
    %v137 = vsel %vm135, %v136, %v134
    %v138 = vmul.f32 %v110, %v125
    %v139 = vmul.f32 %v111, %v137
    %v140 = vmul.f32 %v112, %v138
    %v141 = vmul.f32 %v113, %v139
    %v142 = vadd.f32 %v140, %v141
    %v143 = vadd.f32 %v142, 0.0
    %144 = vst [vmem:[#allocation7] sm:$0xff] %v143
    // Predicated region
    $region18: #{tpu_custom_call.1} parent=1 // pred_check
      _
    $region19: #{tpu_custom_call.1} parent=1 // pred_check_branch
      %146 = sbr.rel (0) target = $region21
    $region20: #{tpu_custom_call.1} parent=1 // pred_region
      %148 = vsyncadd [#allocation4], 0
      %s150 = sshll.u32 [#allocation7], 4
      %s151 = int_to_ptr.vmem [resolvable:$true] %s150
      %s152 = sshll.u32 %s2, 4
      %s153 = int_to_ptr.hbm [resolvable:$true] %s152
      %155 = dma.vmem_to_hbm [thread:$0]  %s151, 128, %s153, [#allocation4]
    $region21: #{tpu_custom_call.1} parent=1 // pred_fallthru
      _
    // Predicated region
    $region22: #{tpu_custom_call.1} parent=1 // pred_check
      _
    $region23: #{tpu_custom_call.1} parent=1 // pred_check_branch
      %157 = sbr.rel (0) target = $region25
    $region24: #{tpu_custom_call.1} parent=1 // pred_region
      %159 = dma.done [#allocation4], 128
    $region25: #{tpu_custom_call.1} parent=1 // pred_fallthru
      _
    %160 = vsyncpa [#allocation3], 1
    %161 = vsyncpa [#allocation6], 1
    %162 = vsyncpa [#allocation4], 1

</llo_original>
